<compile_context>
chip_gen: v7x
topology: tpu7x:2x2x1
jax: 0.10.0
libtpu: 0.0.40
codegen_flags: <defaults>
</compile_context>

<pallas_src>
import math

import jax
import jax.numpy as jnp
from jax.experimental import pallas as pl
from jax.experimental.pallas import tpu as pltpu

_LANE = 128
_TL_CAP = 4096                  # lane-tile cap (elements)
_TC_CAP = 512                   # sublane-tile cap (rows)
_BLOCK_BYTES = 4 * 1024 * 1024  # ~4 MiB per block (review target 2-4 MiB)
_VMEM_LIMIT = 32 * 1024 * 1024  # covers v5e's 16 MiB default; = default on v6e/v7x


def _pe_add_kernel(x_ref, pe_ref, o_ref):
    # (tc, tl) blocks with identical sublane/lane layout -> one full-width,
    # unmasked VPU add per block.
    o_ref[...] = x_ref[...] + pe_ref[...]


def make_sinusoidal_pe_cw(max_len: int, d_model: int) -> jnp.ndarray:
    """PE built directly in (d_model, max_len) orientation (transpose of pe[0]):
        pe_cw[2k,   l] = sin(l * exp(-2k * ln(10000) / d_model))
        pe_cw[2k+1, l] = cos(l * exp(-2k * ln(10000) / d_model))
    """
    assert d_model % 2 == 0, "d_model must be even (matches the PyTorch module)"
    position = jnp.arange(max_len, dtype=jnp.float32)[None, :]            # (1, L)
    div_term = jnp.exp(
        jnp.arange(0, d_model, 2, dtype=jnp.float32)
        * (-jnp.log(jnp.float32(10000.0)) / d_model)
    )[:, None]                                                            # (d/2, 1)
    angles = div_term * position                                          # (d/2, L)
    pe_cw = jnp.stack([jnp.sin(angles), jnp.cos(angles)], axis=1)         # (d/2, 2, L)
    return pe_cw.reshape(d_model, max_len)                                # (d, L)


def _round_up(x: int, q: int) -> int:
    return ((x + q - 1) // q) * q


def _pick_tile(dim: int, max_tile: int, quantum: int) -> int:
    """Largest multiple of `quantum` that divides `dim` and is <= max_tile;
    falls back to the full extent (always divides dim)."""
    hi = (min(max_tile, dim) // quantum) * quantum
    for cand in range(hi, 0, -quantum):
        if dim % cand == 0:
            return cand
    return dim


def _sublane_quantum(dtype) -> int:
    # 8 for 32-bit, 16 for bf16/f16, 32 for int8/fp8 (packed-sublane native).
    return max(8, 32 // jnp.dtype(dtype).itemsize)


def transformer_pe2d_forward(x: jnp.ndarray, pe_cw: jnp.ndarray) -> jnp.ndarray:
    """x: [B, C, H, W] (NCHW, like PyTorch). pe_cw: [d_model, max_len], d_model == C."""
    B, C, H, W = x.shape
    Cp, max_len = pe_cw.shape
    assert Cp == C, "d_model must equal channel count C"
    assert W <= max_len, "W exceeds positional-encoding max_len"

    HW = H * W
    itemsize = jnp.dtype(x.dtype).itemsize

    # PE pattern along the flat H*W axis repeats with period W; align to lanes.
    period = (W * _LANE) // math.gcd(W, _LANE)     # lcm(W, 128)
    resident_pe = period <= _TL_CAP

    if resident_pe:
        HW_pad = _round_up(HW, period)
        tl = _pick_tile(HW_pad, _TL_CAP, period)   # tl % W == 0 and tl | HW_pad
    else:
        HW_pad = _round_up(HW, _LANE)
        tl = _pick_tile(HW_pad, _TL_CAP, _LANE)

    q = _sublane_quantum(x.dtype)
    rows_budget = max(q, (_BLOCK_BYTES // (tl * itemsize)) // q * q)
    tc = _pick_tile(C, min(_TC_CAP, rows_budget), q)

    # Lane-dense view (B, C, H*W); pad flat spatial axis so stores stay unmasked.
    x3 = x.reshape(B, C, HW)
    if HW_pad != HW:
        x3 = jnp.pad(x3, ((0, 0), (0, 0), (0, HW_pad - HW)))

    if resident_pe:
        # Small (C, tl) PE operand; index_map constant over lane & batch axes ->
        # stays resident in VMEM, no full (C, H*W) materialization or streaming.
        pe_op = jnp.tile(pe_cw[:, :W], (1, tl // W)).astype(x.dtype)       # (C, tl)
        pe_index_map = lambda ci, li, b: (ci, 0)
    else:
        reps = HW_pad // W + 1
        pe_op = jnp.tile(pe_cw[:, :W], (1, reps))[:, :HW_pad].astype(x.dtype)
        pe_index_map = lambda ci, li, b: (ci, li)

    grid = (C // tc, HW_pad // tl, B)

    cost = pl.CostEstimate(
        flops=B * C * HW_pad,
        transcendentals=0,
        bytes_accessed=(2 * B * C * HW_pad + pe_op.size) * itemsize,
    )

    out3 = pl.pallas_call(
        _pe_add_kernel,
        out_shape=jax.ShapeDtypeStruct((B, C, HW_pad), x.dtype),
        grid_spec=pltpu.PrefetchScalarGridSpec(
            num_scalar_prefetch=0,
            grid=grid,
            in_specs=[
                pl.BlockSpec((pl.Squeezed(), tc, tl),
                             lambda ci, li, b: (b, ci, li)),
                pl.BlockSpec((tc, tl), pe_index_map),
            ],
            out_specs=pl.BlockSpec((pl.Squeezed(), tc, tl),
                                   lambda ci, li, b: (b, ci, li)),
        ),
        compiler_params=pltpu.CompilerParams(
            # No accumulator / carried state: all axes parallel so v7x megacore
            # can shard the batch axis too. Default double-buffering kept.
            dimension_semantics=("parallel", "parallel", "parallel"),
            vmem_limit_bytes=_VMEM_LIMIT,
        ),
        cost_estimate=cost,
    )(x3, pe_op)

    if HW_pad != HW:
        out3 = out3[:, :, :HW]

    # eval-mode dropout == identity
    return out3.reshape(B, C, H, W)


if __name__ == "__main__":
    # small shapes consistent with the module (d_model == C); H*W = 128 (lane-dense)
    B, C, H, W = 2, 32, 8, 16
    max_len = 5000

    key = jax.random.PRNGKey(0)
    x = jax.random.normal(key, (B, C, H, W), dtype=jnp.float32)

    pe_cw = make_sinusoidal_pe_cw(max_len, C)          # (C, max_len)

    y = transformer_pe2d_forward(x, pe_cw)
    y = jax.block_until_ready(y)

    # reference check (pure JAX, mirrors the PyTorch forward exactly)
    pe_wc = pe_cw.T                                    # (max_len, C), == pe[0]
    x_nhwc = jnp.transpose(x, (0, 2, 3, 1)).reshape(B * H, W, C)
    ref = (x_nhwc + pe_wc[None, :W, :]).reshape(B, H, W, C)
    ref = jnp.transpose(ref, (0, 3, 1, 2))
    assert jnp.allclose(y, ref, atol=1e-6), "mismatch vs reference"

    print("KERNEL_OK")
</pallas_src>

<mosaic_0001>
module attributes {stable_mosaic.version = 11 : i64} {
  func.func @_pe_add_kernel(%arg0: i32, %arg1: i32, %arg2: i32, %arg3: memref<1x32x128xf32, #tpu.memory_space<vmem>>, %arg4: memref<32x128xf32, #tpu.memory_space<vmem>>, %arg5: memref<1x32x128xf32, #tpu.memory_space<vmem>>) attributes {dimension_semantics = [#tpu.dimension_semantics<parallel>, #tpu.dimension_semantics<parallel>, #tpu.dimension_semantics<parallel>], iteration_bounds = array<i64: 1, 1, 2>, scalar_prefetch = 0 : i64, scratch_operands = 0 : i64, tpu.core_type = #tpu.core_type<tc>, window_params = [{transform_indices = @transform_0, window_bounds = array<i64: 1, 32, 128>}, {transform_indices = @transform_1, window_bounds = array<i64: 32, 128>}, {transform_indices = @transform_2, window_bounds = array<i64: 1, 32, 128>}]} {
    %c0 = arith.constant 0 : index
    %c0_0 = arith.constant 0 : index
    %c0_1 = arith.constant 0 : index
    %0 = vector.load %arg3[%c0, %c0_0, %c0_1] : memref<1x32x128xf32, #tpu.memory_space<vmem>>, vector<1x32x128xf32>
    %1 = vector.shape_cast %0 : vector<1x32x128xf32> to vector<32x128xf32>
    %c0_2 = arith.constant 0 : index
    %c0_3 = arith.constant 0 : index
    %2 = vector.load %arg4[%c0_2, %c0_3] : memref<32x128xf32, #tpu.memory_space<vmem>>, vector<32x128xf32>
    %3 = arith.addf %1, %2 : vector<32x128xf32>
    %c0_4 = arith.constant 0 : index
    %c0_5 = arith.constant 0 : index
    %c0_6 = arith.constant 0 : index
    %4 = vector.load %arg5[%c0_4, %c0_5, %c0_6] : memref<1x32x128xf32, #tpu.memory_space<vmem>>, vector<1x32x128xf32>
    %5 = vector.shape_cast %4 : vector<1x32x128xf32> to vector<32x128xf32>
    %6 = vector.shape_cast %3 : vector<32x128xf32> to vector<1x32x128xf32>
    tpu.vector_store %arg5[%c0_4, %c0_5, %c0_6], %6 {strides = array<i32>} : memref<1x32x128xf32, #tpu.memory_space<vmem>>, vector<1x32x128xf32>,
    return
  }
  func.func @transform_0(%arg0: i32, %arg1: i32, %arg2: i32) -> (i32, i32, i32) {
    %c0_i32 = arith.constant 0 : i32
    return %arg2, %arg0, %arg1 : i32, i32, i32
  }
  func.func @transform_1(%arg0: i32, %arg1: i32, %arg2: i32) -> (i32, i32) {
    %c0_i32 = arith.constant 0 : i32
    %c0_i32_0 = arith.constant 0 : i32
    return %arg0, %c0_i32 : i32, i32
  }
  func.func @transform_2(%arg0: i32, %arg1: i32, %arg2: i32) -> (i32, i32, i32) {
    %c0_i32 = arith.constant 0 : i32
    return %arg2, %arg0, %arg1 : i32, i32, i32
  }
}

</mosaic_0001>

<llo_original>
// kernel: tpu_custom_call.1
$region0: #{tpu_custom_call.1}
  #allocation0 [shape = 'u32[]', space=smem, size = 0x4, offset = 0x4, fixed_abs, tag = 'smem constant byte address 0x4 - core index']
  #allocation1 [shape = 'u32[144,128]{1,0:T(1,128)}', space=vmem, size = 0x12000, scoped, tag = 'internal scratch']
  %s0 = inlined_call_operand.hbm [shape: f32[2,32,128], index: 0, kind: input, shape index: {}]
  %s1 = inlined_call_operand.hbm [shape: f32[32,128], index: 1, kind: input, shape index: {}]
  %s2 = inlined_call_operand.hbm [shape: f32[2,32,128], index: 2, kind: output, shape index: {}]
  %s3 = sld [smem:[#allocation0]]
  $region49: #{tpu_custom_call.1} parent=0
    _
  %s5 = ssub.s32 1, %s3
  %s6 = scalar_select 0, %s5, %s3
  $region1: #{tpu_custom_call.1} parent=0
    #allocation2 [shape = 'u8[32768]{0}', space=vmem, size = 0x8000, scoped, tag = 'input window, operand 0']
    #allocation3 [shape = 's32[2]{0}', space=sflag, size = 0x8, scoped, tag = 'scoped memory for tpu_custom_call.1']
    #allocation4 [shape = 's32[2]{0}', space=sflag, size = 0x8, scoped, tag = 'scoped memory for tpu_custom_call.1']
    #allocation5 [shape = 'u8[16384]{0}', space=vmem, size = 0x4000, scoped, tag = 'input window, operand 1, single buffered']
    #allocation6 [shape = 's32[1]{0}', space=sflag, size = 0x4, scoped, tag = 'scoped memory for tpu_custom_call.1']
    #allocation7 [shape = 'u8[32768]{0}', space=vmem, size = 0x8000, scoped, tag = 'output window, operand 0']
    %7 = vsyncpa [#allocation3], 0
    %s8 = scalar_lea.sflag [#allocation3], 1
    %9 = vsyncpa %s8, 0
    %10 = vsyncpa [#allocation6], 0
    %11 = vsyncpa [#allocation4], 0
    %s12 = scalar_lea.sflag [#allocation4], 1
    %13 = vsyncpa %s12, 0
    loop: start=0, step=1, limit=4
    $region2: #{tpu_custom_call.1} parent=1 // loop_pre_header
      _
    $region3: #{tpu_custom_call.1} parent=1 // loop_header
      %s15 = sphi 0, %s19
      %p16 = scmp.ge.s32.totalorder %s15, 4
      %s22 = sphi 0, %s41
      %s23 = sphi 0, %s37
      %s24 = sphi 0, %s33
      %s25 = sphi 0, %s22
      %s26 = sphi 0, %s23
      %s27 = sphi 0, %s24
      %s28 = sphi 0, %s25
      %s29 = sphi 0, %s26
      %s30 = sphi 0, %s27
      %s48 = sphi 0, %s50
      %s51 = sphi 0, %s48
      %s52 = sphi 0, %s51
      %s68 = sphi 0, %s52
      %s74 = sphi 0, %s76
      %s77 = sphi 0, %s74
      %s78 = sphi 0, %s77
      %s94 = sphi 0, %s78
      %s104 = sphi 0, %s106
      %s107 = sphi 0, %s104
      %s108 = sphi 0, %s107
      %s124 = sphi 0, %s108
    $region4: #{tpu_custom_call.1} parent=1 // loop_header_branch
      %18 = sbr.rel (%p16) target = $region8
    $region5: #{tpu_custom_call.1} parent=1 // loop_body
      %s20 = ssub.s32 %s15, 1
      %s21 = ssub.s32 %s15, 2
      %s31 = sadd.s32 1, %s24
      %p32 = scmp.ge.s32.totalorder %s31, 2
      %s33 = scalar_select %p32, 0, %s31
      %s34 = sadd.s32 1, %s23
      %s35 = scalar_select %p32, %s34, %s23
      %p36 = scmp.ge.s32.totalorder %s35, 1
      %s37 = scalar_select %p36, 0, %s35
      %s38 = sadd.s32 1, %s22
      %s39 = scalar_select %p36, %s38, %s22
      %p40 = scmp.ge.s32.totalorder %s39, 1
      %s41 = scalar_select %p40, 0, %s39
      %s42 = ssub.s32 %s24, %s33
      %s43 = ssub.s32 %s22, %s41
      %s44 = sor.u32 %s42, %s43
      %s45 = ssub.s32 %s23, %s37
      %s46 = sor.u32 %s44, %s45
      %p47 = scmp.eq.s32.totalorder %s46, 0
      %s49 = sadd.s32 %s48, 1
      %s50 = scalar_select %p47, %s48, %s49
      %p53 = pneg %p47
      %p54 = scmp.eq.s32.totalorder %s15, 1
      %p55 = por %p53, %p54
      %p56 = scmp.ne.s32.totalorder %s48, %s51
      %p57 = scmp.eq.s32.totalorder %s15, 0
      %p58 = por %p56, %p57
      %p59 = scmp.ne.s32.totalorder %s48, %s51
      %p60 = scmp.eq.s32.totalorder %s20, 1
      %p61 = por %p59, %p60
      %p62 = scmp.ne.s32.totalorder %s51, %s52
      %p63 = scmp.eq.s32.totalorder %s20, 0
      %p64 = por %p62, %p63
      %p65 = scmp.ne.s32.totalorder %s51, %s52
      %p66 = scmp.eq.s32.totalorder %s21, 1
      %p67 = por %p65, %p66
      %p69 = scmp.ne.s32.totalorder %s52, %s68
      %p70 = scmp.eq.s32.totalorder %s21, 0
      %p71 = por %p69, %p70
      %s72 = ssub.s32 %s22, %s41
      %p73 = scmp.eq.s32.totalorder %s72, 0
      %s75 = sadd.s32 %s74, 1
      %s76 = scalar_select %p73, %s74, %s75
      %p79 = pneg %p73
      %p80 = scmp.eq.s32.totalorder %s15, 1
      %p81 = por %p79, %p80
      %p82 = scmp.ne.s32.totalorder %s74, %s77
      %p83 = scmp.eq.s32.totalorder %s15, 0
      %p84 = por %p82, %p83
      %p85 = scmp.ne.s32.totalorder %s74, %s77
      %p86 = scmp.eq.s32.totalorder %s20, 1
      %p87 = por %p85, %p86
      %p88 = scmp.ne.s32.totalorder %s77, %s78
      %p89 = scmp.eq.s32.totalorder %s20, 0
      %p90 = por %p88, %p89
      %p91 = scmp.ne.s32.totalorder %s77, %s78
      %p92 = scmp.eq.s32.totalorder %s21, 1
      %p93 = por %p91, %p92
      %p95 = scmp.ne.s32.totalorder %s78, %s94
      %p96 = scmp.eq.s32.totalorder %s21, 0
      %p97 = por %p95, %p96
      %s98 = ssub.s32 %s24, %s33
      %s99 = ssub.s32 %s22, %s41
      %s100 = sor.u32 %s98, %s99
      %s101 = ssub.s32 %s23, %s37
      %s102 = sor.u32 %s100, %s101
      %p103 = scmp.eq.s32.totalorder %s102, 0
      %s105 = sadd.s32 %s104, 1
      %s106 = scalar_select %p103, %s104, %s105
      %p109 = pneg %p103
      %p110 = scmp.eq.s32.totalorder %s15, 1
      %p111 = por %p109, %p110
      %p112 = scmp.ne.s32.totalorder %s104, %s107
      %p113 = scmp.eq.s32.totalorder %s15, 0
      %p114 = por %p112, %p113
      %p115 = scmp.ne.s32.totalorder %s104, %s107
      %p116 = scmp.eq.s32.totalorder %s20, 1
      %p117 = por %p115, %p116
      %p118 = scmp.ne.s32.totalorder %s107, %s108
      %p119 = scmp.eq.s32.totalorder %s20, 0
      %p120 = por %p118, %p119
      %p121 = scmp.ne.s32.totalorder %s107, %s108
      %p122 = scmp.eq.s32.totalorder %s21, 1
      %p123 = por %p121, %p122
      %p125 = scmp.ne.s32.totalorder %s108, %s124
      %p126 = scmp.eq.s32.totalorder %s21, 0
      %p127 = por %p125, %p126
      %p128 = scmp.le.s32.totalorder 1, %s15
      %p129 = scmp.lt.s32.totalorder %s15, 3
      %p130 = pnand %p128, %p129
      %p131 = pneg %p130
      // Predicated region
      $region9: #{tpu_custom_call.1} parent=5 // pred_check
        _
      $region10: #{tpu_custom_call.1} parent=5 // pred_check_branch
        %133 = sbr.rel (%p130) target = $region12
      $region11: #{tpu_custom_call.1} parent=5 // pred_region
        %s134 = ssub.s32 %s15, 1
        // Predicated region
        $region13: #{tpu_custom_call.1} parent=11 // pred_check
          %p135 = pneg %p90
        $region14: #{tpu_custom_call.1} parent=11 // pred_check_branch
          %137 = sbr.rel (%p135) target = $region16
        $region15: #{tpu_custom_call.1} parent=11 // pred_region
          %s138 = smul.u32 4, %s25
          %s140 = ssub.s32 512, 512
          %141 = vsyncadd [#allocation6], %s140
          %s142 = smul.addr %s138, 128
          %s143 = scalar_lea.hbm %s1, %s142
          %s144 = sshll.u32 [#allocation5], 4
          %s145 = int_to_ptr.vmem [resolvable:$true] %s144
          %150 = dma.hbm_to_vmem [thread:$0]  %s143, 512, %s145, [#allocation6], 128, 128, 8
        $region16: #{tpu_custom_call.1} parent=11 // pred_fallthru
          _
      $region12: #{tpu_custom_call.1} parent=5 // pred_fallthru
        _
      %p151 = scmp.lt.s32.totalorder %s15, 2
      // Predicated region
      $region17: #{tpu_custom_call.1} parent=5 // pred_check
        %p152 = pneg %p151
      $region18: #{tpu_custom_call.1} parent=5 // pred_check_branch
        %154 = sbr.rel (%p152) target = $region20
      $region19: #{tpu_custom_call.1} parent=5 // pred_region
        // Predicated region
        $region21: #{tpu_custom_call.1} parent=19 // pred_check
          %p155 = pneg %p58
        $region22: #{tpu_custom_call.1} parent=19 // pred_check_branch
          %157 = sbr.rel (%p155) target = $region24
        $region23: #{tpu_custom_call.1} parent=19 // pred_region
          %s158 = sand.u32 %s48, 1
          %s159 = scalar_lea.sflag [#allocation3], %s158
          %s160 = sand.u32 %s48, 1
          %s161 = smul.addr %s160, 32
          %s162 = scalar_lea.vmem [#allocation2], %s161
          %s163 = smul.u32 4, %s22
          %s165 = ssub.s32 512, 512
          %166 = vsyncadd %s159, %s165
          %s167 = sadd.s32 %s23, %s163
          %s168 = smul.addr %s24, 4
          %s169 = sadd.s32 %s167, %s168
          %s170 = smul.addr %s169, 128
          %s171 = scalar_lea.hbm %s0, %s170
          %s172 = sshll.u32 %s162, 4
          %s173 = int_to_ptr.vmem [resolvable:$true] %s172
          %178 = dma.hbm_to_vmem [thread:$0]  %s171, 512, %s173, %s159, 128, 128, 8
        $region24: #{tpu_custom_call.1} parent=19 // pred_fallthru
          _
      $region20: #{tpu_custom_call.1} parent=5 // pred_fallthru
        _
      %p179 = scmp.le.s32.totalorder 1, %s15
      %p180 = scmp.lt.s32.totalorder %s15, 3
      %p181 = pnand %p179, %p180
      %p182 = pneg %p181
      // Predicated region
      $region25: #{tpu_custom_call.1} parent=5 // pred_check
        _
      $region26: #{tpu_custom_call.1} parent=5 // pred_check_branch
        %184 = sbr.rel (%p181) target = $region28
      $region27: #{tpu_custom_call.1} parent=5 // pred_region
        %s185 = ssub.s32 %s15, 1
        %s186 = sand.u32 %s51, 1
        %s187 = scalar_lea.sflag [#allocation3], %s186
        %s188 = sand.u32 %s51, 1
        %s189 = smul.addr %s188, 32
        %s190 = scalar_lea.vmem [#allocation2], %s189
        // Predicated region
        $region29: #{tpu_custom_call.1} parent=27 // pred_check
          %p191 = pneg %p64
        $region30: #{tpu_custom_call.1} parent=27 // pred_check_branch
          %193 = sbr.rel (%p191) target = $region32
        $region31: #{tpu_custom_call.1} parent=27 // pred_region
          %194 = dma.done %s187, 512
        $region32: #{tpu_custom_call.1} parent=27 // pred_fallthru
          _
        // Predicated region
        $region33: #{tpu_custom_call.1} parent=27 // pred_check
          %p195 = pneg %p90
        $region34: #{tpu_custom_call.1} parent=27 // pred_check_branch
          %197 = sbr.rel (%p195) target = $region36
        $region35: #{tpu_custom_call.1} parent=27 // pred_region
          %198 = dma.done [#allocation6], 512
        $region36: #{tpu_custom_call.1} parent=27 // pred_fallthru
          _
        %s199 = sand.u32 %s51, 1
        %s200 = scalar_lea.sflag [#allocation3], %s199
        %s201 = sand.u32 %s51, 1
        %s202 = smul.addr %s201, 32
        %s203 = scalar_lea.vmem [#allocation2], %s202
        %p204 = pneg %p64
        %p205 = pneg %p61
        %p206 = pneg %p90
        %p207 = pneg %p87
        %p208 = pneg %p120
        %p209 = pneg %p117
        %s210 = sand.u32 %s107, 1
        %s211 = scalar_lea.sflag [#allocation4], %s210
        %s212 = sand.u32 %s107, 1
        %s213 = smul.addr %s212, 32
        %s214 = scalar_lea.vmem [#allocation7], %s213
        %s215 = smul.u32 4, %s25
        %s216 = smul.u32 4, %s25
        %s217 = smul.u32 4, %s25
        %v218 = vld [vmem:[%s190] sm:$0xff]
        %v219 = vld [vmem:[%s190 + $0x8] sm:$0xff]
        %v220 = vld [vmem:[%s190 + $0x10] sm:$0xff]
        %v221 = vld [vmem:[%s190 + $0x18] sm:$0xff]
        %v222 = vld [vmem:[#allocation5] sm:$0xff]
        %v223 = vld [vmem:[#allocation5 + $0x8] sm:$0xff]
        %v224 = vld [vmem:[#allocation5 + $0x10] sm:$0xff]
        %v225 = vld [vmem:[#allocation5 + $0x18] sm:$0xff]
        %v226 = vadd.f32 %v218, %v222
        %v227 = vadd.f32 %v219, %v223
        %v228 = vadd.f32 %v220, %v224
        %v229 = vadd.f32 %v221, %v225
        %230 = vst [vmem:[%s214] sm:$0xff] %v226
        %231 = vst [vmem:[%s214 + $0x8] sm:$0xff] %v227
        %232 = vst [vmem:[%s214 + $0x10] sm:$0xff] %v228
        %233 = vst [vmem:[%s214 + $0x18] sm:$0xff] %v229
        %s234 = sand.u32 %s107, 1
        %s235 = scalar_lea.sflag [#allocation4], %s234
        %s236 = sand.u32 %s107, 1
        %s237 = smul.addr %s236, 32
        %s238 = scalar_lea.vmem [#allocation7], %s237
        // Predicated region
        $region37: #{tpu_custom_call.1} parent=27 // pred_check
          %p239 = pneg %p117
        $region38: #{tpu_custom_call.1} parent=27 // pred_check_branch
          %241 = sbr.rel (%p239) target = $region40
        $region39: #{tpu_custom_call.1} parent=27 // pred_region
          %s242 = smul.u32 4, %s25
          %s244 = ssub.s32 512, 512
          %245 = vsyncadd %s235, %s244
          %s246 = sadd.s32 %s26, %s242
          %s247 = smul.addr %s27, 4
          %s248 = sadd.s32 %s246, %s247
          %s249 = smul.addr %s248, 128
          %s250 = scalar_lea.hbm %s2, %s249
          %s251 = sshll.u32 %s238, 4
          %s252 = int_to_ptr.vmem [resolvable:$true] %s251
          %257 = dma.vmem_to_hbm [thread:$0]  %s252, 512, %s250, %s235, 128, 128, 8
        $region40: #{tpu_custom_call.1} parent=27 // pred_fallthru
          _
      $region28: #{tpu_custom_call.1} parent=5 // pred_fallthru
        _
      %p258 = scmp.le.s32.totalorder 2, %s15
      // Predicated region
      $region41: #{tpu_custom_call.1} parent=5 // pred_check
        %p259 = pneg %p258
      $region42: #{tpu_custom_call.1} parent=5 // pred_check_branch
        %261 = sbr.rel (%p259) target = $region44
      $region43: #{tpu_custom_call.1} parent=5 // pred_region
        %s262 = ssub.s32 %s15, 2
        // Predicated region
        $region45: #{tpu_custom_call.1} parent=43 // pred_check
          %p263 = pneg %p123
        $region46: #{tpu_custom_call.1} parent=43 // pred_check_branch
          %265 = sbr.rel (%p263) target = $region48
        $region47: #{tpu_custom_call.1} parent=43 // pred_region
          %s266 = sand.u32 %s108, 1
          %s267 = scalar_lea.sflag [#allocation4], %s266
          %s268 = sand.u32 %s108, 1
          %s269 = smul.addr %s268, 32
          %s270 = scalar_lea.vmem [#allocation7], %s269
          %271 = dma.done %s267, 512
        $region48: #{tpu_custom_call.1} parent=43 // pred_fallthru
          _
      $region44: #{tpu_custom_call.1} parent=5 // pred_fallthru
        _
    $region6: #{tpu_custom_call.1} parent=1 // loop_footer
      %s19 = sadd.s32 1, %s15
    $region7: #{tpu_custom_call.1} parent=1 // loop_footer_branch
      %14 = sbr.rel target = $region3
    $region8: #{tpu_custom_call.1} parent=1 // loop_exit
      _
    %272 = vsyncpa [#allocation3], 1
    %s273 = scalar_lea.sflag [#allocation3], 1
    %274 = vsyncpa %s273, 1
    %275 = vsyncpa [#allocation6], 1
    %276 = vsyncpa [#allocation4], 1
    %s277 = scalar_lea.sflag [#allocation4], 1
    %278 = vsyncpa %s277, 1

</llo_original>
